<compile_context>
chip_gen: v7x
topology: tpu7x:2x2x1
jax: 0.10.0
libtpu: 0.0.40
codegen_flags: <defaults>
</compile_context>

<pallas_src>
import jax
import jax.numpy as jnp
from jax.experimental import pallas as pl
from jax.experimental.pallas import tpu as pltpu


_LANE = 512          # lane width of the flattened slab (multiple of 128)
_MAX_TILE_R = 1024   # max sublane rows per tile (f32 tile = 2 MiB); v5e-safe
_FAST_PATH_BYTES = 1 << 20   # below this output size, skip Pallas entirely


def _mask_mul_kernel(x_ref, m_ref, o_ref):
    # Pure elementwise hot path on the VPU over the full VMEM tile.
    # Casts (narrow mask -> out dtype) are free VPU work; HBM BW binds first.
    o_ref[...] = x_ref[...].astype(o_ref.dtype) * m_ref[...].astype(o_ref.dtype)


def _round_up(a, b):
    return -(-a // b) * b


def _sublane_granule(dt):
    # Sub-32-bit dtypes pack along sublanes: 8 rows (f32) / 16 (bf16) / 32 (i8,bool).
    return 8 * max(1, 4 // jnp.dtype(dt).itemsize)


def mask_layer(x, mask, *, force_pallas=False):
    """Pallas equivalent of MaskLayer.forward(x, mask) = torch.mul(x, mask).

    x and mask must have the same shape.  mask may be a narrower dtype
    (int8 / bool / bf16); it is cast inside the kernel.  The result dtype is
    jnp.result_type(x.dtype, mask.dtype), matching torch.mul promotion.
    """
    assert x.shape == mask.shape, "MaskLayer kernel expects same-shaped x and mask"
    orig_shape = x.shape
    out_dtype = jnp.result_type(x.dtype, mask.dtype)
    total = int(x.size)

    x_itemsize = jnp.dtype(x.dtype).itemsize
    m_itemsize = jnp.dtype(mask.dtype).itemsize
    o_itemsize = jnp.dtype(out_dtype).itemsize

    # Fast path: tiny tensors fuse better as a plain XLA multiply than paying
    # pallas_call launch/step overhead + losing fusion across the custom call.
    if total == 0 or (not force_pallas and total * o_itemsize < _FAST_PATH_BYTES):
        return (x.astype(out_dtype) * mask.astype(out_dtype)).reshape(orig_shape)

    # Lane-dense layout: flatten to (n_rows, 512).  Only pad to the lane
    # width (<512 elements); never round rows up to the tile size.
    lane = _LANE
    n_rows = -(-total // lane)
    padded_total = n_rows * lane

    x_flat = x.reshape(-1)
    m_flat = mask.reshape(-1)
    if padded_total != total:
        pad = padded_total - total
        x_flat = jnp.pad(x_flat, (0, pad))
        m_flat = jnp.pad(m_flat, (0, pad))

    x2 = x_flat.reshape(n_rows, lane)
    m2 = m_flat.reshape(n_rows, lane)

    # Tile rows: a multiple of the sublane packing granule of every dtype
    # involved (8 for f32, 16 for bf16, 32 for int8/bool), capped at 1024.
    granule = max(_sublane_granule(x.dtype),
                  _sublane_granule(mask.dtype),
                  _sublane_granule(out_dtype))

    if n_rows <= granule:
        # Degenerate small slab: one block equal to the full array dims
        # (explicitly allowed by the (8,128)-or-full-dim rule).
        tile_r = n_rows
    else:
        tile_r = min(_MAX_TILE_R, granule * (n_rows // granule))
        # Ensure >= 2 grid steps when possible so both TensorCores (v7x)
        # get work under dimension_semantics=("parallel",).
        if -(-n_rows // tile_r) < 2 and tile_r > granule:
            half = _round_up(tile_r // 2, granule)
            if half < tile_r:
                tile_r = half

    grid = (pl.cdiv(n_rows, tile_r),)

    cost = pl.CostEstimate(
        flops=total,
        transcendentals=0,
        bytes_accessed=total * (x_itemsize + m_itemsize + o_itemsize),
    )

    out = pl.pallas_call(
        _mask_mul_kernel,
        out_shape=jax.ShapeDtypeStruct((n_rows, lane), out_dtype),
        grid=grid,
        in_specs=[
            pl.BlockSpec((tile_r, lane), lambda i: (i, 0)),
            pl.BlockSpec((tile_r, lane), lambda i: (i, 0)),
        ],
        out_specs=pl.BlockSpec((tile_r, lane), lambda i: (i, 0)),
        compiler_params=pltpu.CompilerParams(
            dimension_semantics=("parallel",),
        ),
        cost_estimate=cost,
    )(x2, m2)

    out_flat = out.reshape(-1)
    if padded_total != total:
        out_flat = out_flat[:total]
    return out_flat.reshape(orig_shape)


if __name__ == "__main__":
    key = jax.random.PRNGKey(0)
    kx, km, kx2, km2 = jax.random.split(key, 4)

    # 1) Small NCHW input (matches module usage) -> fast path (fused XLA mul).
    x_small = jax.random.normal(kx, (2, 4, 16, 16), dtype=jnp.float32)
    mask_small = (jax.random.uniform(km, (2, 4, 16, 16)) > 0.5).astype(jnp.float32)
    y_small = mask_layer(x_small, mask_small)
    jax.block_until_ready(y_small)
    assert jnp.allclose(y_small, x_small * mask_small), "fast-path mismatch"

    # 2) Same small input forced through the Pallas kernel (single full-array block).
    y_forced = mask_layer(x_small, mask_small, force_pallas=True)
    jax.block_until_ready(y_forced)
    assert jnp.allclose(y_forced, x_small * mask_small), "forced Pallas mismatch"

    # 3) Total not a multiple of 512, forced through Pallas
    #    (exercises the lane pad + output re-slice path).
    x_odd = jax.random.normal(kx2, (3, 5, 16, 17), dtype=jnp.float32)
    mask_odd = (jax.random.uniform(km2, (3, 5, 16, 17)) > 0.5).astype(jnp.float32)
    y_odd = mask_layer(x_odd, mask_odd, force_pallas=True)
    jax.block_until_ready(y_odd)
    assert jnp.allclose(y_odd, x_odd * mask_odd), "ragged/pad path mismatch"

    # 4) Medium tensor with an int8 binary mask -> real Pallas path:
    #    >= 2 grid steps, ragged final block, narrow-mask HBM traffic saving.
    x_med = jax.random.normal(kx, (3, 16, 100, 128), dtype=jnp.float32)
    mask_med = (jax.random.uniform(km, (3, 16, 100, 128)) > 0.5).astype(jnp.int8)
    y_med = mask_layer(x_med, mask_med)
    jax.block_until_ready(y_med)
    assert jnp.allclose(y_med, x_med * mask_med.astype(jnp.float32)), \
        "int8-mask Pallas path mismatch"

    print("KERNEL_OK")
</pallas_src>

<mosaic_0001>
module attributes {stable_mosaic.version = 11 : i64} {
  func.func @_mask_mul_kernel(%arg0: i32, %arg1: memref<4x512xf32, #tpu.memory_space<vmem>>, %arg2: memref<4x512xf32, #tpu.memory_space<vmem>>, %arg3: memref<4x512xf32, #tpu.memory_space<vmem>>) attributes {dimension_semantics = [#tpu.dimension_semantics<parallel>], iteration_bounds = array<i64: 1>, scalar_prefetch = 0 : i64, scratch_operands = 0 : i64, tpu.core_type = #tpu.core_type<tc>, window_params = [{transform_indices = @transform_0, window_bounds = array<i64: 4, 512>}, {transform_indices = @transform_1, window_bounds = array<i64: 4, 512>}, {transform_indices = @transform_2, window_bounds = array<i64: 4, 512>}]} {
    %c0 = arith.constant 0 : index
    %c0_0 = arith.constant 0 : index
    %0 = vector.load %arg1[%c0, %c0_0] : memref<4x512xf32, #tpu.memory_space<vmem>>, vector<4x512xf32>
    %c0_1 = arith.constant 0 : index
    %c0_2 = arith.constant 0 : index
    %1 = vector.load %arg2[%c0_1, %c0_2] : memref<4x512xf32, #tpu.memory_space<vmem>>, vector<4x512xf32>
    %2 = arith.mulf %0, %1 : vector<4x512xf32>
    %c0_3 = arith.constant 0 : index
    %c0_4 = arith.constant 0 : index
    %3 = vector.load %arg3[%c0_3, %c0_4] : memref<4x512xf32, #tpu.memory_space<vmem>>, vector<4x512xf32>
    tpu.vector_store %arg3[%c0_3, %c0_4], %2 {strides = array<i32>} : memref<4x512xf32, #tpu.memory_space<vmem>>, vector<4x512xf32>,
    return
  }
  func.func @transform_0(%arg0: i32) -> (i32, i32) {
    %c0_i32 = arith.constant 0 : i32
    %c0_i32_0 = arith.constant 0 : i32
    return %arg0, %c0_i32 : i32, i32
  }
  func.func @transform_1(%arg0: i32) -> (i32, i32) {
    %c0_i32 = arith.constant 0 : i32
    %c0_i32_0 = arith.constant 0 : i32
    return %arg0, %c0_i32 : i32, i32
  }
  func.func @transform_2(%arg0: i32) -> (i32, i32) {
    %c0_i32 = arith.constant 0 : i32
    %c0_i32_0 = arith.constant 0 : i32
    return %arg0, %c0_i32 : i32, i32
  }
}

</mosaic_0001>

<llo_original>
// kernel: tpu_custom_call.1
$region0: #{tpu_custom_call.1}
  #allocation0 [shape = 'u32[]', space=smem, size = 0x4, offset = 0x4, fixed_abs, tag = 'smem constant byte address 0x4 - core index']
  #allocation1 [shape = 'u32[144,128]{1,0:T(1,128)}', space=vmem, size = 0x12000, scoped, tag = 'internal scratch']
  %s0 = inlined_call_operand.hbm [shape: f32[4,512], index: 0, kind: input, shape index: {}]
  %s1 = inlined_call_operand.hbm [shape: f32[4,512], index: 1, kind: input, shape index: {}]
  %s2 = inlined_call_operand.hbm [shape: f32[4,512], index: 2, kind: output, shape index: {}]
  %s3 = sld [smem:[#allocation0]]
  $region26: #{tpu_custom_call.1} parent=0
    _
  %s5 = ssub.s32 1, %s3
  %s6 = scalar_select 0, %s5, %s3
  $region1: #{tpu_custom_call.1} parent=0
    #allocation2 [shape = 'u8[8192]{0}', space=vmem, size = 0x2000, scoped, tag = 'input window, operand 0, single buffered']
    #allocation3 [shape = 's32[1]{0}', space=sflag, size = 0x4, scoped, tag = 'scoped memory for tpu_custom_call.1']
    #allocation4 [shape = 's32[1]{0}', space=sflag, size = 0x4, scoped, tag = 'scoped memory for tpu_custom_call.1']
    #allocation5 [shape = 'u8[8192]{0}', space=vmem, size = 0x2000, scoped, tag = 'input window, operand 1, single buffered']
    #allocation6 [shape = 's32[1]{0}', space=sflag, size = 0x4, scoped, tag = 'scoped memory for tpu_custom_call.1']
    #allocation7 [shape = 'u8[8192]{0}', space=vmem, size = 0x2000, scoped, tag = 'output window, operand 0, single buffered']
    %7 = vsyncpa [#allocation3], 0
    %8 = vsyncpa [#allocation6], 0
    %9 = vsyncpa [#allocation4], 0
    // Predicated region
    $region2: #{tpu_custom_call.1} parent=1 // pred_check
      _
    $region3: #{tpu_custom_call.1} parent=1 // pred_check_branch
      %11 = sbr.rel (0) target = $region5
    $region4: #{tpu_custom_call.1} parent=1 // pred_region
      %s13 = ssub.s32 256, 256
      %14 = vsyncadd [#allocation3], %s13
      %s16 = sshll.u32 [#allocation2], 4
      %s17 = int_to_ptr.vmem [resolvable:$true] %s16
      %19 = dma.hbm_to_vmem [thread:$0]  %s0, 256, %s17, [#allocation3]
    $region5: #{tpu_custom_call.1} parent=1 // pred_fallthru
      _
    // Predicated region
    $region6: #{tpu_custom_call.1} parent=1 // pred_check
      _
    $region7: #{tpu_custom_call.1} parent=1 // pred_check_branch
      %21 = sbr.rel (0) target = $region9
    $region8: #{tpu_custom_call.1} parent=1 // pred_region
      %s23 = ssub.s32 256, 256
      %24 = vsyncadd [#allocation6], %s23
      %s26 = sshll.u32 [#allocation5], 4
      %s27 = int_to_ptr.vmem [resolvable:$true] %s26
      %29 = dma.hbm_to_vmem [thread:$0]  %s1, 256, %s27, [#allocation6]
    $region9: #{tpu_custom_call.1} parent=1 // pred_fallthru
      _
    // Predicated region
    $region10: #{tpu_custom_call.1} parent=1 // pred_check
      _
    $region11: #{tpu_custom_call.1} parent=1 // pred_check_branch
      %31 = sbr.rel (0) target = $region13
    $region12: #{tpu_custom_call.1} parent=1 // pred_region
      %32 = dma.done [#allocation3], 256
    $region13: #{tpu_custom_call.1} parent=1 // pred_fallthru
      _
    // Predicated region
    $region14: #{tpu_custom_call.1} parent=1 // pred_check
      _
    $region15: #{tpu_custom_call.1} parent=1 // pred_check_branch
      %34 = sbr.rel (0) target = $region17
    $region16: #{tpu_custom_call.1} parent=1 // pred_region
      %35 = dma.done [#allocation6], 256
    $region17: #{tpu_custom_call.1} parent=1 // pred_fallthru
      _
    %v36 = vld [vmem:[#allocation2] sm:$0xff]
    %v37 = vld [vmem:[#allocation2 + $0x8] sm:$0xff]
    %v38 = vld [vmem:[#allocation5] sm:$0xff]
    %v39 = vld [vmem:[#allocation5 + $0x8] sm:$0xff]
    %v40 = vmul.f32 %v36, %v38
    %v41 = vmul.f32 %v37, %v39
    %42 = vst [vmem:[#allocation7] sm:$0xff] %v40
    %43 = vst [vmem:[#allocation7 + $0x8] sm:$0xff] %v41
    // Predicated region
    $region18: #{tpu_custom_call.1} parent=1 // pred_check
      _
    $region19: #{tpu_custom_call.1} parent=1 // pred_check_branch
      %45 = sbr.rel (0) target = $region21
    $region20: #{tpu_custom_call.1} parent=1 // pred_region
      %s47 = ssub.s32 256, 256
      %48 = vsyncadd [#allocation4], %s47
      %s50 = sshll.u32 [#allocation7], 4
      %s51 = int_to_ptr.vmem [resolvable:$true] %s50
      %53 = dma.vmem_to_hbm [thread:$0]  %s51, 256, %s2, [#allocation4]
    $region21: #{tpu_custom_call.1} parent=1 // pred_fallthru
      _
    // Predicated region
    $region22: #{tpu_custom_call.1} parent=1 // pred_check
      _
    $region23: #{tpu_custom_call.1} parent=1 // pred_check_branch
      %55 = sbr.rel (0) target = $region25
    $region24: #{tpu_custom_call.1} parent=1 // pred_region
      %56 = dma.done [#allocation4], 256
    $region25: #{tpu_custom_call.1} parent=1 // pred_fallthru
      _
    %57 = vsyncpa [#allocation3], 1
    %58 = vsyncpa [#allocation6], 1
    %59 = vsyncpa [#allocation4], 1

</llo_original>
